<compile_context>
chip_gen: v5e
topology: v5e:2x2
jax: 0.10.0
libtpu: 0.0.40
codegen_flags: <defaults>
</compile_context>

<pallas_src>
import math

import jax
import jax.numpy as jnp
from jax.experimental import pallas as pl
from jax.experimental.pallas import tpu as pltpu


# ----------------------------------------------------------------------------
# Buffer construction (deterministic, mirrors the PyTorch __init__)
# ----------------------------------------------------------------------------
def build_buffers(d_model: int, max_len: int, max_nslide: int):
    div_term = jnp.exp(
        jnp.arange(0, d_model, 2, dtype=jnp.float32) * (-math.log(10000.0) / d_model)
    )  # [d_model // 2]

    x_idx = jnp.arange(max_len, dtype=jnp.float32)[:, None]   # [L, 1]
    y_idx = jnp.arange(max_len, dtype=jnp.float32)[None, :]   # [1, L]
    # cantor_diagonal(p, q) = (p + q) * (1 + p + q) / 2 + q
    position = (x_idx + y_idx) * (1.0 + x_idx + y_idx) / 2.0 + y_idx  # [L, L]
    angles = position[:, :, None] * div_term[None, None, :]           # [L, L, d/2]

    pe = jnp.zeros((max_len, max_len, d_model), dtype=jnp.float32)
    pe = pe.at[:, :, 0::2].set(jnp.sin(angles))
    pe = pe.at[:, :, 1::2].set(jnp.cos(angles))

    slide_pos = jnp.arange(max_nslide, dtype=jnp.float32)[:, None]  # [S, 1]
    slide_angles = slide_pos * div_term[None, :]                     # [S, d/2]
    slide_pe = jnp.zeros((max_nslide, d_model), dtype=jnp.float32)
    slide_pe = slide_pe.at[:, 0::2].set(jnp.sin(slide_angles))
    slide_pe = slide_pe.at[:, 1::2].set(jnp.cos(slide_angles))

    return pe, slide_pe


# ----------------------------------------------------------------------------
# Pallas kernel
# ----------------------------------------------------------------------------
def _pe_add_kernel(x_ref, fidx_ref, sidx_ref, pe_ref, spe_ref, o_ref):
    # x_ref:    (TM, d_model)           current row tile
    # fidx_ref: (TM, 1) int32           flat index into pe table (x*L + y)
    # sidx_ref: (TM, 1) int32           slide index
    # pe_ref:   (max_len*max_len, d_model)  VMEM-resident table
    # spe_ref:  (max_nslide, d_model)       VMEM-resident table
    tm = x_ref.shape[0]
    n_pe = pe_ref.shape[0]
    n_spe = spe_ref.shape[0]

    fidx = fidx_ref[...]   # (TM, 1)
    sidx = sidx_ref[...]   # (TM, 1)

    # One-hot gathers on the MXU (exact: HIGHEST precision keeps f32 values).
    pe_onehot = (jax.lax.broadcasted_iota(jnp.int32, (tm, n_pe), 1) == fidx
                 ).astype(jnp.float32)
    spe_onehot = (jax.lax.broadcasted_iota(jnp.int32, (tm, n_spe), 1) == sidx
                  ).astype(jnp.float32)

    pe_rows = jnp.dot(pe_onehot, pe_ref[...],
                      preferred_element_type=jnp.float32,
                      precision=jax.lax.Precision.HIGHEST)
    spe_rows = jnp.dot(spe_onehot, spe_ref[...],
                       preferred_element_type=jnp.float32,
                       precision=jax.lax.Precision.HIGHEST)

    o_ref[...] = (x_ref[...].astype(jnp.float32) + pe_rows + spe_rows
                  ).astype(o_ref.dtype)


# ----------------------------------------------------------------------------
# Wrapper
# ----------------------------------------------------------------------------
def concat_positional_encoding_2d(x, coords, pe, slide_pe, *, tm=None):
    """x: [seq_len, d_model] f32, coords: [seq_len, 3] int32.

    Returns x + pe[coords[:,1], coords[:,2]] + slide_pe[coords[:,0]].
    Dropout is the identity here (inference / eval mode).
    """
    seq_len, d_model = x.shape
    max_len = pe.shape[0]
    max_nslide = slide_pe.shape[0]
    n_pe = max_len * max_len
    pe_flat = pe.reshape(n_pe, d_model)          # glue reshape, plain JAX

    # Precompute + clamp gather indices (out-of-range coords would otherwise
    # silently select nothing with the in-kernel one-hot gather).
    cx = jnp.clip(coords[:, 1].astype(jnp.int32), 0, max_len - 1)
    cy = jnp.clip(coords[:, 2].astype(jnp.int32), 0, max_len - 1)
    flat_idx = (cx * max_len + cy)[:, None]                                  # (S, 1)
    slide_idx = jnp.clip(coords[:, 0].astype(jnp.int32), 0, max_nslide - 1)[:, None]

    # Tile size: big tiles amortize per-step overhead; small seqs use one tile.
    if tm is None:
        tm = min(512, max(8, int(pl.next_power_of_2(seq_len))))
    padded = pl.cdiv(seq_len, tm) * tm
    if padded != seq_len:
        pad = padded - seq_len
        x_in = jnp.pad(x, ((0, pad), (0, 0)))
        flat_idx = jnp.pad(flat_idx, ((0, pad), (0, 0)))
        slide_idx = jnp.pad(slide_idx, ((0, pad), (0, 0)))
    else:
        x_in = x

    grid = (padded // tm,)

    # VMEM budget: resident tables + double-buffered x/out/idx tiles + margin.
    itemsize = jnp.dtype(x.dtype).itemsize
    table_bytes = n_pe * d_model * 4 + max_nslide * d_model * 4
    tile_bytes = tm * d_model * itemsize
    est = 2 * table_bytes + 6 * tile_bytes + 8 * tm * 4 + (2 << 20)
    vmem_limit = int(min(max(est, 16 << 20), 64 << 20))

    grid_spec = pltpu.PrefetchScalarGridSpec(
        num_scalar_prefetch=0,
        grid=grid,
        in_specs=[
            pl.BlockSpec((tm, d_model), lambda i: (i, 0)),       # x tile
            pl.BlockSpec((tm, 1), lambda i: (i, 0)),             # flat_idx tile
            pl.BlockSpec((tm, 1), lambda i: (i, 0)),             # slide_idx tile
            pl.BlockSpec((n_pe, d_model), lambda i: (0, 0)),     # pe table (resident)
            pl.BlockSpec((max_nslide, d_model), lambda i: (0, 0)),  # slide_pe (resident)
        ],
        out_specs=pl.BlockSpec((tm, d_model), lambda i: (i, 0)),
    )

    out = pl.pallas_call(
        _pe_add_kernel,
        out_shape=jax.ShapeDtypeStruct((padded, d_model), x.dtype),
        grid_spec=grid_spec,
        compiler_params=pltpu.CompilerParams(
            dimension_semantics=("parallel",),
            vmem_limit_bytes=vmem_limit,
        ),
    )(x_in, flat_idx, slide_idx, pe_flat, slide_pe)

    return out[:seq_len]


# ----------------------------------------------------------------------------
# Reference (plain JAX) for verification
# ----------------------------------------------------------------------------
def reference(x, coords, pe, slide_pe):
    return x + pe[coords[:, 1], coords[:, 2]] + slide_pe[coords[:, 0]]


def _make_inputs(key, seq_len, d_model, max_len, max_nslide):
    kx, ks, kc = jax.random.split(key, 3)
    x = jax.random.normal(kx, (seq_len, d_model), dtype=jnp.float32)
    slide_idx = jax.random.randint(ks, (seq_len, 1), 0, max_nslide, dtype=jnp.int32)
    xy = jax.random.randint(kc, (seq_len, 2), 0, max_len, dtype=jnp.int32)
    coords = jnp.concatenate([slide_idx, xy], axis=1)  # [seq_len, 3]
    return x, coords


if __name__ == "__main__":
    d_model = 32
    max_len = 16
    max_nslide = 10

    pe, slide_pe = build_buffers(d_model, max_len, max_nslide)
    key = jax.random.PRNGKey(0)
    k1, k2 = jax.random.split(key)

    # Case 1: seq_len == single tile
    x, coords = _make_inputs(k1, 8, d_model, max_len, max_nslide)
    out = jax.block_until_ready(concat_positional_encoding_2d(x, coords, pe, slide_pe))
    ref = reference(x, coords, pe, slide_pe)
    assert out.shape == x.shape
    assert jnp.allclose(out, ref, atol=1e-5, rtol=1e-5), "mismatch vs reference (case 1)"

    # Case 2: seq_len not a multiple of the tile (exercises padding path)
    x2, coords2 = _make_inputs(k2, 13, d_model, max_len, max_nslide)
    out2 = jax.block_until_ready(concat_positional_encoding_2d(x2, coords2, pe, slide_pe))
    ref2 = reference(x2, coords2, pe, slide_pe)
    assert out2.shape == x2.shape
    assert jnp.allclose(out2, ref2, atol=1e-5, rtol=1e-5), "mismatch vs reference (case 2)"

    print("KERNEL_OK")
</pallas_src>

<mosaic_0001>
module attributes {stable_mosaic.version = 11 : i64} {
  func.func @_pe_add_kernel(%arg0: i32, %arg1: memref<8x32xf32, #tpu.memory_space<vmem>>, %arg2: memref<8x1xi32, #tpu.memory_space<vmem>>, %arg3: memref<8x1xi32, #tpu.memory_space<vmem>>, %arg4: memref<256x32xf32, #tpu.memory_space<vmem>>, %arg5: memref<10x32xf32, #tpu.memory_space<vmem>>, %arg6: memref<8x32xf32, #tpu.memory_space<vmem>>) attributes {dimension_semantics = [#tpu.dimension_semantics<parallel>], iteration_bounds = array<i64: 1>, scalar_prefetch = 0 : i64, scratch_operands = 0 : i64, tpu.core_type = #tpu.core_type<tc>, window_params = [{transform_indices = @transform_0, window_bounds = array<i64: 8, 32>}, {transform_indices = @transform_1, window_bounds = array<i64: 8, 1>}, {transform_indices = @transform_2, window_bounds = array<i64: 8, 1>}, {pipeline_mode = #tpu.pipeline_mode<synchronous>, transform_indices = @transform_3, window_bounds = array<i64: 256, 32>}, {pipeline_mode = #tpu.pipeline_mode<synchronous>, transform_indices = @transform_4, window_bounds = array<i64: 10, 32>}, {transform_indices = @transform_5, window_bounds = array<i64: 8, 32>}]} {
    %c0 = arith.constant 0 : index
    %c0_0 = arith.constant 0 : index
    %0 = vector.load %arg2[%c0, %c0_0] : memref<8x1xi32, #tpu.memory_space<vmem>>, vector<8x1xi32>
    %c0_1 = arith.constant 0 : index
    %c0_2 = arith.constant 0 : index
    %1 = vector.load %arg3[%c0_1, %c0_2] : memref<8x1xi32, #tpu.memory_space<vmem>>, vector<8x1xi32>
    %2 = tpu.iota {dimensions = array<i32: 1>} : vector<8x256xi32>
    %3 = vector.broadcast %0 : vector<8x1xi32> to vector<8x256xi32>
    %4 = arith.cmpi eq, %2, %3 : vector<8x256xi32>
    %5 = arith.extui %4 : vector<8x256xi1> to vector<8x256xi32>
    %6 = arith.sitofp %5 : vector<8x256xi32> to vector<8x256xf32>
    %7 = tpu.iota {dimensions = array<i32: 1>} : vector<8x10xi32>
    %8 = vector.broadcast %1 : vector<8x1xi32> to vector<8x10xi32>
    %9 = arith.cmpi eq, %7, %8 : vector<8x10xi32>
    %10 = arith.extui %9 : vector<8x10xi1> to vector<8x10xi32>
    %11 = arith.sitofp %10 : vector<8x10xi32> to vector<8x10xf32>
    %c0_3 = arith.constant 0 : index
    %c0_4 = arith.constant 0 : index
    %12 = vector.load %arg4[%c0_3, %c0_4] : memref<256x32xf32, #tpu.memory_space<vmem>>, vector<256x32xf32>
    %cst = arith.constant dense<0.000000e+00> : vector<8x32xf32>
    %13 = tpu.matmul %6, %12, %cst {dimension_numbers = #tpu.dot_dimension_numbers<[1], [0], [0], [1], [0, 0, 1, 1], [], []>, precision = #tpu.contract_precision<fp32>} : vector<8x256xf32>, vector<256x32xf32>, vector<8x32xf32> -> vector<8x32xf32>
    %c0_5 = arith.constant 0 : index
    %c0_6 = arith.constant 0 : index
    %14 = vector.load %arg5[%c0_5, %c0_6] : memref<10x32xf32, #tpu.memory_space<vmem>>, vector<10x32xf32>
    %cst_7 = arith.constant dense<0.000000e+00> : vector<8x32xf32>
    %15 = tpu.matmul %11, %14, %cst_7 {dimension_numbers = #tpu.dot_dimension_numbers<[1], [0], [0], [1], [0, 0, 1, 1], [], []>, precision = #tpu.contract_precision<fp32>} : vector<8x10xf32>, vector<10x32xf32>, vector<8x32xf32> -> vector<8x32xf32>
    %c0_8 = arith.constant 0 : index
    %c0_9 = arith.constant 0 : index
    %16 = vector.load %arg1[%c0_8, %c0_9] : memref<8x32xf32, #tpu.memory_space<vmem>>, vector<8x32xf32>
    %17 = arith.addf %16, %13 : vector<8x32xf32>
    %18 = arith.addf %17, %15 : vector<8x32xf32>
    %c0_10 = arith.constant 0 : index
    %c0_11 = arith.constant 0 : index
    %19 = vector.load %arg6[%c0_10, %c0_11] : memref<8x32xf32, #tpu.memory_space<vmem>>, vector<8x32xf32>
    tpu.vector_store %arg6[%c0_10, %c0_11], %18 {strides = array<i32>} : memref<8x32xf32, #tpu.memory_space<vmem>>, vector<8x32xf32>,
    return
  }
  func.func @transform_0(%arg0: i32) -> (i32, i32) {
    %c0_i32 = arith.constant 0 : i32
    %c0_i32_0 = arith.constant 0 : i32
    return %arg0, %c0_i32 : i32, i32
  }
  func.func @transform_1(%arg0: i32) -> (i32, i32) {
    %c0_i32 = arith.constant 0 : i32
    %c0_i32_0 = arith.constant 0 : i32
    return %arg0, %c0_i32 : i32, i32
  }
  func.func @transform_2(%arg0: i32) -> (i32, i32) {
    %c0_i32 = arith.constant 0 : i32
    %c0_i32_0 = arith.constant 0 : i32
    return %arg0, %c0_i32 : i32, i32
  }
  func.func @transform_3(%arg0: i32) -> (i32, i32) {
    %c0_i32 = arith.constant 0 : i32
    %c0_i32_0 = arith.constant 0 : i32
    %c0_i32_1 = arith.constant 0 : i32
    return %c0_i32, %c0_i32_0 : i32, i32
  }
  func.func @transform_4(%arg0: i32) -> (i32, i32) {
    %c0_i32 = arith.constant 0 : i32
    %c0_i32_0 = arith.constant 0 : i32
    %c0_i32_1 = arith.constant 0 : i32
    return %c0_i32, %c0_i32_0 : i32, i32
  }
  func.func @transform_5(%arg0: i32) -> (i32, i32) {
    %c0_i32 = arith.constant 0 : i32
    %c0_i32_0 = arith.constant 0 : i32
    return %arg0, %c0_i32 : i32, i32
  }
}

</mosaic_0001>

<llo_original>
// kernel: tpu_custom_call.1
$region0: #{tpu_custom_call.1}
  #allocation0 [shape = 'u32[]', space=smem, size = 0x4, offset = 0x4, fixed_abs, tag = 'smem constant byte address 0x4 - core index']
  #allocation1 [shape = 'u32[72,128]{1,0:T(1,128)}', space=vmem, size = 0x9000, scoped, tag = 'internal scratch']
  %s0 = inlined_call_operand.vmem [shape: f32[8,32], index: 0, kind: input, shape index: {}]
  %s1 = inlined_call_operand.vmem [shape: s32[8,1], index: 1, kind: input, shape index: {}]
  %s2 = inlined_call_operand.vmem [shape: s32[8,1], index: 2, kind: input, shape index: {}]
  %s3 = inlined_call_operand.vmem [shape: f32[256,32], index: 3, kind: input, shape index: {}]
  %s4 = inlined_call_operand.vmem [shape: f32[10,32], index: 4, kind: input, shape index: {}]
  %s5 = inlined_call_operand.hbm [shape: f32[8,32], index: 5, kind: output, shape index: {}]
  %s6 = sld [smem:[#allocation0]]
  $region30: #{tpu_custom_call.1} parent=0
    _
  %s8 = ssub.s32 1, %s6
  %s9 = scalar_select 0, %s8, %s6
  $region1: #{tpu_custom_call.1} parent=0
    #allocation2 [shape = 'u8[4096]{0}', space=vmem, size = 0x1000, scoped, tag = 'output window, operand 0, single buffered']
    #allocation3 [shape = 's32[1]{0}', space=sflag, size = 0x4, scoped, tag = 'scoped memory for tpu_custom_call.1']
    %10 = vsyncpa [#allocation3], 0
    // Predicated region
    $region2: #{tpu_custom_call.1} parent=1 // pred_check
      _
    $region3: #{tpu_custom_call.1} parent=1 // pred_check_branch
      %12 = sbr.rel (0) target = $region5
    $region4: #{tpu_custom_call.1} parent=1 // pred_region
      _
    $region5: #{tpu_custom_call.1} parent=1 // pred_fallthru
      _
    // Predicated region
    $region6: #{tpu_custom_call.1} parent=1 // pred_check
      _
    $region7: #{tpu_custom_call.1} parent=1 // pred_check_branch
      %14 = sbr.rel (0) target = $region9
    $region8: #{tpu_custom_call.1} parent=1 // pred_region
      _
    $region9: #{tpu_custom_call.1} parent=1 // pred_fallthru
      _
    // Predicated region
    $region10: #{tpu_custom_call.1} parent=1 // pred_check
      _
    $region11: #{tpu_custom_call.1} parent=1 // pred_check_branch
      %16 = sbr.rel (0) target = $region13
    $region12: #{tpu_custom_call.1} parent=1 // pred_region
      _
    $region13: #{tpu_custom_call.1} parent=1 // pred_fallthru
      _
    // Predicated region
    $region14: #{tpu_custom_call.1} parent=1 // pred_check
      _
    $region15: #{tpu_custom_call.1} parent=1 // pred_check_branch
      %18 = sbr.rel (0) target = $region17
    $region16: #{tpu_custom_call.1} parent=1 // pred_region
      _
    $region17: #{tpu_custom_call.1} parent=1 // pred_fallthru
      _
    // Predicated region
    $region18: #{tpu_custom_call.1} parent=1 // pred_check
      _
    $region19: #{tpu_custom_call.1} parent=1 // pred_check_branch
      %20 = sbr.rel (0) target = $region21
    $region20: #{tpu_custom_call.1} parent=1 // pred_region
      _
    $region21: #{tpu_custom_call.1} parent=1 // pred_fallthru
      _
    %v21 = vld [vmem:[%s1] sm:$0xff]
    %v22 = vld [vmem:[%s2] sm:$0xff]
    %v23 = vlaneseq
    %v24 = vand.u32 %v23, 127
    %v25 = vadd.s32 %v24, 128
    %26 = vset.pattern.permute.xlu0 0
    %27 = vperm.xlu0 %26, %v21
    %v28 = vpop.permute.xlu0 %27
    %vm29 = vcmp.eq.s32.totalorder %v24, %v28
    %vm30 = vcmp.eq.s32.totalorder %v25, %v28
    %v31 = vsel %vm29, 1, 0
    %v32 = vsel %vm30, 1, 0
    %v33 = vcvt.s32.f32 %v31
    %v34 = vcvt.s32.f32 %v32
    %35 = vset.pattern.permute.xlu0 0
    %36 = vperm.xlu0 %35, %v22
    %v37 = vpop.permute.xlu0 %36
    %vm38 = vcmp.eq.s32.totalorder %v24, %v37
    %v39 = vsel %vm38, 1, 0
    %v40 = vcvt.s32.f32 %v39
    %v41 = vld [vmem:[%s3] sm:$0xff]
    %v42 = vld [vmem:[%s3 + $0x8] sm:$0xff]
    %v43 = vld [vmem:[%s3 + $0x10] sm:$0xff]
    %v44 = vld [vmem:[%s3 + $0x18] sm:$0xff]
    %v45 = vld [vmem:[%s3 + $0x20] sm:$0xff]
    %v46 = vld [vmem:[%s3 + $0x28] sm:$0xff]
    %v47 = vld [vmem:[%s3 + $0x30] sm:$0xff]
    %v48 = vld [vmem:[%s3 + $0x38] sm:$0xff]
    %v49 = vld [vmem:[%s3 + $0x40] sm:$0xff]
    %v50 = vld [vmem:[%s3 + $0x48] sm:$0xff]
    %v51 = vld [vmem:[%s3 + $0x50] sm:$0xff]
    %v52 = vld [vmem:[%s3 + $0x58] sm:$0xff]
    %v53 = vld [vmem:[%s3 + $0x60] sm:$0xff]
    %v54 = vld [vmem:[%s3 + $0x68] sm:$0xff]
    %v55 = vld [vmem:[%s3 + $0x70] sm:$0xff]
    %v56 = vld [vmem:[%s3 + $0x78] sm:$0xff]
    %v57 = vld [vmem:[%s3 + $0x80] sm:$0xff]
    %v58 = vld [vmem:[%s3 + $0x88] sm:$0xff]
    %v59 = vld [vmem:[%s3 + $0x90] sm:$0xff]
    %v60 = vld [vmem:[%s3 + $0x98] sm:$0xff]
    %v61 = vld [vmem:[%s3 + $0xa0] sm:$0xff]
    %v62 = vld [vmem:[%s3 + $0xa8] sm:$0xff]
    %v63 = vld [vmem:[%s3 + $0xb0] sm:$0xff]
    %v64 = vld [vmem:[%s3 + $0xb8] sm:$0xff]
    %v65 = vld [vmem:[%s3 + $0xc0] sm:$0xff]
    %v66 = vld [vmem:[%s3 + $0xc8] sm:$0xff]
    %v67 = vld [vmem:[%s3 + $0xd0] sm:$0xff]
    %v68 = vld [vmem:[%s3 + $0xd8] sm:$0xff]
    %v69 = vld [vmem:[%s3 + $0xe0] sm:$0xff]
    %v70 = vld [vmem:[%s3 + $0xe8] sm:$0xff]
    %v71 = vld [vmem:[%s3 + $0xf0] sm:$0xff]
    %v72 = vld [vmem:[%s3 + $0xf8] sm:$0xff]
    %v73 = vand.u32 %v56, 4294901760
    %74 = vmatpush.msra.mxu0 %v73
    %v75 = vand.u32 %v55, 4294901760
    %76 = vmatpush.msra.mxu0 %v75
    %v77 = vand.u32 %v54, 4294901760
    %78 = vmatpush.msra.mxu0 %v77
    %v79 = vand.u32 %v53, 4294901760
    %80 = vmatpush.msra.mxu0 %v79
    %v81 = vand.u32 %v52, 4294901760
    %82 = vmatpush.msra.mxu0 %v81
    %v83 = vand.u32 %v51, 4294901760
    %84 = vmatpush.msra.mxu0 %v83
    %v85 = vand.u32 %v50, 4294901760
    %86 = vmatpush.msra.mxu0 %v85
    %v87 = vand.u32 %v49, 4294901760
    %88 = vmatpush.msra.mxu0 %v87
    %v89 = vand.u32 %v48, 4294901760
    %90 = vmatpush.msra.mxu0 %v89
    %v91 = vand.u32 %v47, 4294901760
    %92 = vmatpush.msra.mxu0 %v91
    %v93 = vand.u32 %v46, 4294901760
    %94 = vmatpush.msra.mxu0 %v93
    %v95 = vand.u32 %v45, 4294901760
    %96 = vmatpush.msra.mxu0 %v95
    %v97 = vand.u32 %v44, 4294901760
    %98 = vmatpush.msra.mxu0 %v97
    %v99 = vand.u32 %v43, 4294901760
    %100 = vmatpush.msra.mxu0 %v99
    %v101 = vand.u32 %v42, 4294901760
    %102 = vmatpush.msra.mxu0 %v101
    %v103 = vand.u32 %v41, 4294901760
    %104 = vmatpush.msra.mxu0 %v103
    %v105 = vand.u32 %v33, 4294901760
    %v106 = vsub.f32 %v33, %v105
    %v107 = vand.u32 %v106, 4294901760
    %v108 = vsub.f32 %v106, %v107
    %v109 = vand.u32 %v108, 4294901760
    %110 = vmatmul.f32.gmra.mxu0 %v109
    %v111 = vpop.f32.mrf.mxu0
    %v112 = vadd.f32 0.0, %v111
    %113 = vdwg.mxu0
    %v114 = vand.u32 %v56, 4294901760
    %v115 = vsub.f32 %v56, %v114
    %v116 = vand.u32 %v115, 4294901760
    %v117 = vsub.f32 %v115, %v116
    %v118 = vand.u32 %v117, 4294901760
    %119 = vmatpush.msra.mxu0 %v118
    %v120 = vand.u32 %v55, 4294901760
    %v121 = vsub.f32 %v55, %v120
    %v122 = vand.u32 %v121, 4294901760
    %v123 = vsub.f32 %v121, %v122
    %v124 = vand.u32 %v123, 4294901760
    %125 = vmatpush.msra.mxu0 %v124
    %v126 = vand.u32 %v54, 4294901760
    %v127 = vsub.f32 %v54, %v126
    %v128 = vand.u32 %v127, 4294901760
    %v129 = vsub.f32 %v127, %v128
    %v130 = vand.u32 %v129, 4294901760
    %131 = vmatpush.msra.mxu0 %v130
    %v132 = vand.u32 %v53, 4294901760
    %v133 = vsub.f32 %v53, %v132
    %v134 = vand.u32 %v133, 4294901760
    %v135 = vsub.f32 %v133, %v134
    %v136 = vand.u32 %v135, 4294901760
    %137 = vmatpush.msra.mxu0 %v136
    %v138 = vand.u32 %v52, 4294901760
    %v139 = vsub.f32 %v52, %v138
    %v140 = vand.u32 %v139, 4294901760
    %v141 = vsub.f32 %v139, %v140
    %v142 = vand.u32 %v141, 4294901760
    %143 = vmatpush.msra.mxu0 %v142
    %v144 = vand.u32 %v51, 4294901760
    %v145 = vsub.f32 %v51, %v144
    %v146 = vand.u32 %v145, 4294901760
    %v147 = vsub.f32 %v145, %v146
    %v148 = vand.u32 %v147, 4294901760
    %149 = vmatpush.msra.mxu0 %v148
    %v150 = vand.u32 %v50, 4294901760
    %v151 = vsub.f32 %v50, %v150
    %v152 = vand.u32 %v151, 4294901760
    %v153 = vsub.f32 %v151, %v152
    %v154 = vand.u32 %v153, 4294901760
    %155 = vmatpush.msra.mxu0 %v154
    %v156 = vand.u32 %v49, 4294901760
    %v157 = vsub.f32 %v49, %v156
    %v158 = vand.u32 %v157, 4294901760
    %v159 = vsub.f32 %v157, %v158
    %v160 = vand.u32 %v159, 4294901760
    %161 = vmatpush.msra.mxu0 %v160
    %v162 = vand.u32 %v48, 4294901760
    %v163 = vsub.f32 %v48, %v162
    %v164 = vand.u32 %v163, 4294901760
    %v165 = vsub.f32 %v163, %v164
    %v166 = vand.u32 %v165, 4294901760
    %167 = vmatpush.msra.mxu0 %v166
    %v168 = vand.u32 %v47, 4294901760
    %v169 = vsub.f32 %v47, %v168
    %v170 = vand.u32 %v169, 4294901760
    %v171 = vsub.f32 %v169, %v170
    %v172 = vand.u32 %v171, 4294901760
    %173 = vmatpush.msra.mxu0 %v172
    %v174 = vand.u32 %v46, 4294901760
    %v175 = vsub.f32 %v46, %v174
    %v176 = vand.u32 %v175, 4294901760
    %v177 = vsub.f32 %v175, %v176
    %v178 = vand.u32 %v177, 4294901760
    %179 = vmatpush.msra.mxu0 %v178
    %v180 = vand.u32 %v45, 4294901760
    %v181 = vsub.f32 %v45, %v180
    %v182 = vand.u32 %v181, 4294901760
    %v183 = vsub.f32 %v181, %v182
    %v184 = vand.u32 %v183, 4294901760
    %185 = vmatpush.msra.mxu0 %v184
    %v186 = vand.u32 %v44, 4294901760
    %v187 = vsub.f32 %v44, %v186
    %v188 = vand.u32 %v187, 4294901760
    %v189 = vsub.f32 %v187, %v188
    %v190 = vand.u32 %v189, 4294901760
    %191 = vmatpush.msra.mxu0 %v190
    %v192 = vand.u32 %v43, 4294901760
    %v193 = vsub.f32 %v43, %v192
    %v194 = vand.u32 %v193, 4294901760
    %v195 = vsub.f32 %v193, %v194
    %v196 = vand.u32 %v195, 4294901760
    %197 = vmatpush.msra.mxu0 %v196
    %v198 = vand.u32 %v42, 4294901760
    %v199 = vsub.f32 %v42, %v198
    %v200 = vand.u32 %v199, 4294901760
    %v201 = vsub.f32 %v199, %v200
    %v202 = vand.u32 %v201, 4294901760
    %203 = vmatpush.msra.mxu0 %v202
    %v204 = vand.u32 %v41, 4294901760
    %v205 = vsub.f32 %v41, %v204
    %v206 = vand.u32 %v205, 4294901760
    %v207 = vsub.f32 %v205, %v206
    %v208 = vand.u32 %v207, 4294901760
    %209 = vmatpush.msra.mxu0 %v208
    %v210 = vand.u32 %v33, 4294901760
    %211 = vmatmul.f32.gmra.mxu0 %v210
    %v212 = vpop.f32.mrf.mxu0
    %v213 = vadd.f32 %v112, %v212
    %214 = vdwg.mxu0
    %v215 = vand.u32 %v56, 4294901760
    %v216 = vsub.f32 %v56, %v215
    %217 = vmatpush.msra.mxu0 %v216
    %v218 = vand.u32 %v55, 4294901760
    %v219 = vsub.f32 %v55, %v218
    %220 = vmatpush.msra.mxu0 %v219
    %v221 = vand.u32 %v54, 4294901760
    %v222 = vsub.f32 %v54, %v221
    %223 = vmatpush.msra.mxu0 %v222
    %v224 = vand.u32 %v53, 4294901760
    %v225 = vsub.f32 %v53, %v224
    %226 = vmatpush.msra.mxu0 %v225
    %v227 = vand.u32 %v52, 4294901760
    %v228 = vsub.f32 %v52, %v227
    %229 = vmatpush.msra.mxu0 %v228
    %v230 = vand.u32 %v51, 4294901760
    %v231 = vsub.f32 %v51, %v230
    %232 = vmatpush.msra.mxu0 %v231
    %v233 = vand.u32 %v50, 4294901760
    %v234 = vsub.f32 %v50, %v233
    %235 = vmatpush.msra.mxu0 %v234
    %v236 = vand.u32 %v49, 4294901760
    %v237 = vsub.f32 %v49, %v236
    %238 = vmatpush.msra.mxu0 %v237
    %v239 = vand.u32 %v48, 4294901760
    %v240 = vsub.f32 %v48, %v239
    %241 = vmatpush.msra.mxu0 %v240
    %v242 = vand.u32 %v47, 4294901760
    %v243 = vsub.f32 %v47, %v242
    %244 = vmatpush.msra.mxu0 %v243
    %v245 = vand.u32 %v46, 4294901760
    %v246 = vsub.f32 %v46, %v245
    %247 = vmatpush.msra.mxu0 %v246
    %v248 = vand.u32 %v45, 4294901760
    %v249 = vsub.f32 %v45, %v248
    %250 = vmatpush.msra.mxu0 %v249
    %v251 = vand.u32 %v44, 4294901760
    %v252 = vsub.f32 %v44, %v251
    %253 = vmatpush.msra.mxu0 %v252
    %v254 = vand.u32 %v43, 4294901760
    %v255 = vsub.f32 %v43, %v254
    %256 = vmatpush.msra.mxu0 %v255
    %v257 = vand.u32 %v42, 4294901760
    %v258 = vsub.f32 %v42, %v257
    %259 = vmatpush.msra.mxu0 %v258
    %v260 = vand.u32 %v41, 4294901760
    %v261 = vsub.f32 %v41, %v260
    %262 = vmatpush.msra.mxu0 %v261
    %v263 = vand.u32 %v33, 4294901760
    %v264 = vsub.f32 %v33, %v263
    %265 = vmatmul.f32.gmra.mxu0 %v264
    %v266 = vpop.f32.mrf.mxu0
    %v267 = vadd.f32 %v213, %v266
    %268 = vdwg.mxu0
    %v269 = vand.u32 %v56, 4294901760
    %270 = vmatpush.msra.mxu0 %v269
    %v271 = vand.u32 %v55, 4294901760
    %272 = vmatpush.msra.mxu0 %v271
    %v273 = vand.u32 %v54, 4294901760
    %274 = vmatpush.msra.mxu0 %v273
    %v275 = vand.u32 %v53, 4294901760
    %276 = vmatpush.msra.mxu0 %v275
    %v277 = vand.u32 %v52, 4294901760
    %278 = vmatpush.msra.mxu0 %v277
    %v279 = vand.u32 %v51, 4294901760
    %280 = vmatpush.msra.mxu0 %v279
    %v281 = vand.u32 %v50, 4294901760
    %282 = vmatpush.msra.mxu0 %v281
    %v283 = vand.u32 %v49, 4294901760
    %284 = vmatpush.msra.mxu0 %v283
    %v285 = vand.u32 %v48, 4294901760
    %286 = vmatpush.msra.mxu0 %v285
    %v287 = vand.u32 %v47, 4294901760
    %288 = vmatpush.msra.mxu0 %v287
    %v289 = vand.u32 %v46, 4294901760
    %290 = vmatpush.msra.mxu0 %v289
    %v291 = vand.u32 %v45, 4294901760
    %292 = vmatpush.msra.mxu0 %v291
    %v293 = vand.u32 %v44, 4294901760
    %294 = vmatpush.msra.mxu0 %v293
    %v295 = vand.u32 %v43, 4294901760
    %296 = vmatpush.msra.mxu0 %v295
    %v297 = vand.u32 %v42, 4294901760
    %298 = vmatpush.msra.mxu0 %v297
    %v299 = vand.u32 %v41, 4294901760
    %300 = vmatpush.msra.mxu0 %v299
    %v301 = vand.u32 %v33, 4294901760
    %v302 = vsub.f32 %v33, %v301
    %v303 = vand.u32 %v302, 4294901760
    %304 = vmatmul.f32.gmra.mxu0 %v303
    %v305 = vpop.f32.mrf.mxu0
    %v306 = vadd.f32 %v267, %v305
    %307 = vdwg.mxu0
    %v308 = vand.u32 %v56, 4294901760
    %v309 = vsub.f32 %v56, %v308
    %v310 = vand.u32 %v309, 4294901760
    %311 = vmatpush.msra.mxu0 %v310
    %v312 = vand.u32 %v55, 4294901760
    %v313 = vsub.f32 %v55, %v312
    %v314 = vand.u32 %v313, 4294901760
    %315 = vmatpush.msra.mxu0 %v314
    %v316 = vand.u32 %v54, 4294901760
    %v317 = vsub.f32 %v54, %v316
    %v318 = vand.u32 %v317, 4294901760
    %319 = vmatpush.msra.mxu0 %v318
    %v320 = vand.u32 %v53, 4294901760
    %v321 = vsub.f32 %v53, %v320
    %v322 = vand.u32 %v321, 4294901760
    %323 = vmatpush.msra.mxu0 %v322
    %v324 = vand.u32 %v52, 4294901760
    %v325 = vsub.f32 %v52, %v324
    %v326 = vand.u32 %v325, 4294901760
    %327 = vmatpush.msra.mxu0 %v326
    %v328 = vand.u32 %v51, 4294901760
    %v329 = vsub.f32 %v51, %v328
    %v330 = vand.u32 %v329, 4294901760
    %331 = vmatpush.msra.mxu0 %v330
    %v332 = vand.u32 %v50, 4294901760
    %v333 = vsub.f32 %v50, %v332
    %v334 = vand.u32 %v333, 4294901760
    %335 = vmatpush.msra.mxu0 %v334
    %v336 = vand.u32 %v49, 4294901760
    %v337 = vsub.f32 %v49, %v336
    %v338 = vand.u32 %v337, 4294901760
    %339 = vmatpush.msra.mxu0 %v338
    %v340 = vand.u32 %v48, 4294901760
    %v341 = vsub.f32 %v48, %v340
    %v342 = vand.u32 %v341, 4294901760
    %343 = vmatpush.msra.mxu0 %v342
    %v344 = vand.u32 %v47, 4294901760
    %v345 = vsub.f32 %v47, %v344
    %v346 = vand.u32 %v345, 4294901760
    %347 = vmatpush.msra.mxu0 %v346
    %v348 = vand.u32 %v46, 4294901760
    %v349 = vsub.f32 %v46, %v348
    %v350 = vand.u32 %v349, 4294901760
    %351 = vmatpush.msra.mxu0 %v350
    %v352 = vand.u32 %v45, 4294901760
    %v353 = vsub.f32 %v45, %v352
    %v354 = vand.u32 %v353, 4294901760
    %355 = vmatpush.msra.mxu0 %v354
    %v356 = vand.u32 %v44, 4294901760
    %v357 = vsub.f32 %v44, %v356
    %v358 = vand.u32 %v357, 4294901760
    %359 = vmatpush.msra.mxu0 %v358
    %v360 = vand.u32 %v43, 4294901760
    %v361 = vsub.f32 %v43, %v360
    %v362 = vand.u32 %v361, 4294901760
    %363 = vmatpush.msra.mxu0 %v362
    %v364 = vand.u32 %v42, 4294901760
    %v365 = vsub.f32 %v42, %v364
    %v366 = vand.u32 %v365, 4294901760
    %367 = vmatpush.msra.mxu0 %v366
    %v368 = vand.u32 %v41, 4294901760
    %v369 = vsub.f32 %v41, %v368
    %v370 = vand.u32 %v369, 4294901760
    %371 = vmatpush.msra.mxu0 %v370
    %v372 = vand.u32 %v33, 4294901760
    %373 = vmatmul.f32.gmra.mxu0 %v372
    %v374 = vpop.f32.mrf.mxu0
    %v375 = vadd.f32 %v306, %v374
    %376 = vdwg.mxu0
    %v377 = vand.u32 %v56, 4294901760
    %378 = vmatpush.msra.mxu0 %v377
    %v379 = vand.u32 %v55, 4294901760
    %380 = vmatpush.msra.mxu0 %v379
    %v381 = vand.u32 %v54, 4294901760
    %382 = vmatpush.msra.mxu0 %v381
    %v383 = vand.u32 %v53, 4294901760
    %384 = vmatpush.msra.mxu0 %v383
    %v385 = vand.u32 %v52, 4294901760
    %386 = vmatpush.msra.mxu0 %v385
    %v387 = vand.u32 %v51, 4294901760
    %388 = vmatpush.msra.mxu0 %v387
    %v389 = vand.u32 %v50, 4294901760
    %390 = vmatpush.msra.mxu0 %v389
    %v391 = vand.u32 %v49, 4294901760
    %392 = vmatpush.msra.mxu0 %v391
    %v393 = vand.u32 %v48, 4294901760
    %394 = vmatpush.msra.mxu0 %v393
    %v395 = vand.u32 %v47, 4294901760
    %396 = vmatpush.msra.mxu0 %v395
    %v397 = vand.u32 %v46, 4294901760
    %398 = vmatpush.msra.mxu0 %v397
    %v399 = vand.u32 %v45, 4294901760
    %400 = vmatpush.msra.mxu0 %v399
    %v401 = vand.u32 %v44, 4294901760
    %402 = vmatpush.msra.mxu0 %v401
    %v403 = vand.u32 %v43, 4294901760
    %404 = vmatpush.msra.mxu0 %v403
    %v405 = vand.u32 %v42, 4294901760
    %406 = vmatpush.msra.mxu0 %v405
    %v407 = vand.u32 %v41, 4294901760
    %408 = vmatpush.msra.mxu0 %v407
    %v409 = vand.u32 %v33, 4294901760
    %410 = vmatmul.f32.gmra.mxu0 %v409
    %v411 = vpop.f32.mrf.mxu0
    %v412 = vadd.f32 %v375, %v411
    %413 = vdwg.mxu0
    %v414 = vand.u32 %v72, 4294901760
    %415 = vmatpush.msra.mxu0 %v414
    %v416 = vand.u32 %v71, 4294901760
    %417 = vmatpush.msra.mxu0 %v416
    %v418 = vand.u32 %v70, 4294901760
    %419 = vmatpush.msra.mxu0 %v418
    %v420 = vand.u32 %v69, 4294901760
    %421 = vmatpush.msra.mxu0 %v420
    %v422 = vand.u32 %v68, 4294901760
    %423 = vmatpush.msra.mxu0 %v422
    %v424 = vand.u32 %v67, 4294901760
    %425 = vmatpush.msra.mxu0 %v424
    %v426 = vand.u32 %v66, 4294901760
    %427 = vmatpush.msra.mxu0 %v426
    %v428 = vand.u32 %v65, 4294901760
    %429 = vmatpush.msra.mxu0 %v428
    %v430 = vand.u32 %v64, 4294901760
    %431 = vmatpush.msra.mxu0 %v430
    %v432 = vand.u32 %v63, 4294901760
    %433 = vmatpush.msra.mxu0 %v432
    %v434 = vand.u32 %v62, 4294901760
    %435 = vmatpush.msra.mxu0 %v434
    %v436 = vand.u32 %v61, 4294901760
    %437 = vmatpush.msra.mxu0 %v436
    %v438 = vand.u32 %v60, 4294901760
    %439 = vmatpush.msra.mxu0 %v438
    %v440 = vand.u32 %v59, 4294901760
    %441 = vmatpush.msra.mxu0 %v440
    %v442 = vand.u32 %v58, 4294901760
    %443 = vmatpush.msra.mxu0 %v442
    %v444 = vand.u32 %v57, 4294901760
    %445 = vmatpush.msra.mxu0 %v444
    %v446 = vand.u32 %v34, 4294901760
    %v447 = vsub.f32 %v34, %v446
    %v448 = vand.u32 %v447, 4294901760
    %v449 = vsub.f32 %v447, %v448
    %v450 = vand.u32 %v449, 4294901760
    %451 = vmatmul.f32.gmra.mxu0 %v450
    %v452 = vpop.f32.mrf.mxu0
    %v453 = vadd.f32 %v412, %v452
    %454 = vdwg.mxu0
    %v455 = vand.u32 %v72, 4294901760
    %v456 = vsub.f32 %v72, %v455
    %v457 = vand.u32 %v456, 4294901760
    %v458 = vsub.f32 %v456, %v457
    %v459 = vand.u32 %v458, 4294901760
    %460 = vmatpush.msra.mxu0 %v459
    %v461 = vand.u32 %v71, 4294901760
    %v462 = vsub.f32 %v71, %v461
    %v463 = vand.u32 %v462, 4294901760
    %v464 = vsub.f32 %v462, %v463
    %v465 = vand.u32 %v464, 4294901760
    %466 = vmatpush.msra.mxu0 %v465
    %v467 = vand.u32 %v70, 4294901760
    %v468 = vsub.f32 %v70, %v467
    %v469 = vand.u32 %v468, 4294901760
    %v470 = vsub.f32 %v468, %v469
    %v471 = vand.u32 %v470, 4294901760
    %472 = vmatpush.msra.mxu0 %v471
    %v473 = vand.u32 %v69, 4294901760
    %v474 = vsub.f32 %v69, %v473
    %v475 = vand.u32 %v474, 4294901760
    %v476 = vsub.f32 %v474, %v475
    %v477 = vand.u32 %v476, 4294901760
    %478 = vmatpush.msra.mxu0 %v477
    %v479 = vand.u32 %v68, 4294901760
    %v480 = vsub.f32 %v68, %v479
    %v481 = vand.u32 %v480, 4294901760
    %v482 = vsub.f32 %v480, %v481
    %v483 = vand.u32 %v482, 4294901760
    %484 = vmatpush.msra.mxu0 %v483
    %v485 = vand.u32 %v67, 4294901760
    %v486 = vsub.f32 %v67, %v485
    %v487 = vand.u32 %v486, 4294901760
    %v488 = vsub.f32 %v486, %v487
    %v489 = vand.u32 %v488, 4294901760
    %490 = vmatpush.msra.mxu0 %v489
    %v491 = vand.u32 %v66, 4294901760
    %v492 = vsub.f32 %v66, %v491
    %v493 = vand.u32 %v492, 4294901760
    %v494 = vsub.f32 %v492, %v493
    %v495 = vand.u32 %v494, 4294901760
    %496 = vmatpush.msra.mxu0 %v495
    %v497 = vand.u32 %v65, 4294901760
    %v498 = vsub.f32 %v65, %v497
    %v499 = vand.u32 %v498, 4294901760
    %v500 = vsub.f32 %v498, %v499
    %v501 = vand.u32 %v500, 4294901760
    %502 = vmatpush.msra.mxu0 %v501
    %v503 = vand.u32 %v64, 4294901760
    %v504 = vsub.f32 %v64, %v503
    %v505 = vand.u32 %v504, 4294901760
    %v506 = vsub.f32 %v504, %v505
    %v507 = vand.u32 %v506, 4294901760
    %508 = vmatpush.msra.mxu0 %v507
    %v509 = vand.u32 %v63, 4294901760
    %v510 = vsub.f32 %v63, %v509
    %v511 = vand.u32 %v510, 4294901760
    %v512 = vsub.f32 %v510, %v511
    %v513 = vand.u32 %v512, 4294901760
    %514 = vmatpush.msra.mxu0 %v513
    %v515 = vand.u32 %v62, 4294901760
    %v516 = vsub.f32 %v62, %v515
    %v517 = vand.u32 %v516, 4294901760
    %v518 = vsub.f32 %v516, %v517
    %v519 = vand.u32 %v518, 4294901760
    %520 = vmatpush.msra.mxu0 %v519
    %v521 = vand.u32 %v61, 4294901760
    %v522 = vsub.f32 %v61, %v521
    %v523 = vand.u32 %v522, 4294901760
    %v524 = vsub.f32 %v522, %v523
    %v525 = vand.u32 %v524, 4294901760
    %526 = vmatpush.msra.mxu0 %v525
    %v527 = vand.u32 %v60, 4294901760
    %v528 = vsub.f32 %v60, %v527
    %v529 = vand.u32 %v528, 4294901760
    %v530 = vsub.f32 %v528, %v529
    %v531 = vand.u32 %v530, 4294901760
    %532 = vmatpush.msra.mxu0 %v531
    %v533 = vand.u32 %v59, 4294901760
    %v534 = vsub.f32 %v59, %v533
    %v535 = vand.u32 %v534, 4294901760
    %v536 = vsub.f32 %v534, %v535
    %v537 = vand.u32 %v536, 4294901760
    %538 = vmatpush.msra.mxu0 %v537
    %v539 = vand.u32 %v58, 4294901760
    %v540 = vsub.f32 %v58, %v539
    %v541 = vand.u32 %v540, 4294901760
    %v542 = vsub.f32 %v540, %v541
    %v543 = vand.u32 %v542, 4294901760
    %544 = vmatpush.msra.mxu0 %v543
    %v545 = vand.u32 %v57, 4294901760
    %v546 = vsub.f32 %v57, %v545
    %v547 = vand.u32 %v546, 4294901760
    %v548 = vsub.f32 %v546, %v547
    %v549 = vand.u32 %v548, 4294901760
    %550 = vmatpush.msra.mxu0 %v549
    %v551 = vand.u32 %v34, 4294901760
    %552 = vmatmul.f32.gmra.mxu0 %v551
    %v553 = vpop.f32.mrf.mxu0
    %v554 = vadd.f32 %v453, %v553
    %555 = vdwg.mxu0
    %v556 = vand.u32 %v72, 4294901760
    %v557 = vsub.f32 %v72, %v556
    %558 = vmatpush.msra.mxu0 %v557
    %v559 = vand.u32 %v71, 4294901760
    %v560 = vsub.f32 %v71, %v559
    %561 = vmatpush.msra.mxu0 %v560
    %v562 = vand.u32 %v70, 4294901760
    %v563 = vsub.f32 %v70, %v562
    %564 = vmatpush.msra.mxu0 %v563
    %v565 = vand.u32 %v69, 4294901760
    %v566 = vsub.f32 %v69, %v565
    %567 = vmatpush.msra.mxu0 %v566
    %v568 = vand.u32 %v68, 4294901760
    %v569 = vsub.f32 %v68, %v568
    %570 = vmatpush.msra.mxu0 %v569
    %v571 = vand.u32 %v67, 4294901760
    %v572 = vsub.f32 %v67, %v571
    %573 = vmatpush.msra.mxu0 %v572
    %v574 = vand.u32 %v66, 4294901760
    %v575 = vsub.f32 %v66, %v574
    %576 = vmatpush.msra.mxu0 %v575
    %v577 = vand.u32 %v65, 4294901760
    %v578 = vsub.f32 %v65, %v577
    %579 = vmatpush.msra.mxu0 %v578
    %v580 = vand.u32 %v64, 4294901760
    %v581 = vsub.f32 %v64, %v580
    %582 = vmatpush.msra.mxu0 %v581
    %v583 = vand.u32 %v63, 4294901760
    %v584 = vsub.f32 %v63, %v583
    %585 = vmatpush.msra.mxu0 %v584
    %v586 = vand.u32 %v62, 4294901760
    %v587 = vsub.f32 %v62, %v586
    %588 = vmatpush.msra.mxu0 %v587
    %v589 = vand.u32 %v61, 4294901760
    %v590 = vsub.f32 %v61, %v589
    %591 = vmatpush.msra.mxu0 %v590
    %v592 = vand.u32 %v60, 4294901760
    %v593 = vsub.f32 %v60, %v592
    %594 = vmatpush.msra.mxu0 %v593
    %v595 = vand.u32 %v59, 4294901760
    %v596 = vsub.f32 %v59, %v595
    %597 = vmatpush.msra.mxu0 %v596
    %v598 = vand.u32 %v58, 4294901760
    %v599 = vsub.f32 %v58, %v598
    %600 = vmatpush.msra.mxu0 %v599
    %v601 = vand.u32 %v57, 4294901760
    %v602 = vsub.f32 %v57, %v601
    %603 = vmatpush.msra.mxu0 %v602
    %v604 = vand.u32 %v34, 4294901760
    %v605 = vsub.f32 %v34, %v604
    %606 = vmatmul.f32.gmra.mxu0 %v605
    %v607 = vpop.f32.mrf.mxu0
    %v608 = vadd.f32 %v554, %v607
    %609 = vdwg.mxu0
    %v610 = vand.u32 %v72, 4294901760
    %611 = vmatpush.msra.mxu0 %v610
    %v612 = vand.u32 %v71, 4294901760
    %613 = vmatpush.msra.mxu0 %v612
    %v614 = vand.u32 %v70, 4294901760
    %615 = vmatpush.msra.mxu0 %v614
    %v616 = vand.u32 %v69, 4294901760
    %617 = vmatpush.msra.mxu0 %v616
    %v618 = vand.u32 %v68, 4294901760
    %619 = vmatpush.msra.mxu0 %v618
    %v620 = vand.u32 %v67, 4294901760
    %621 = vmatpush.msra.mxu0 %v620
    %v622 = vand.u32 %v66, 4294901760
    %623 = vmatpush.msra.mxu0 %v622
    %v624 = vand.u32 %v65, 4294901760
    %625 = vmatpush.msra.mxu0 %v624
    %v626 = vand.u32 %v64, 4294901760
    %627 = vmatpush.msra.mxu0 %v626
    %v628 = vand.u32 %v63, 4294901760
    %629 = vmatpush.msra.mxu0 %v628
    %v630 = vand.u32 %v62, 4294901760
    %631 = vmatpush.msra.mxu0 %v630
    %v632 = vand.u32 %v61, 4294901760
    %633 = vmatpush.msra.mxu0 %v632
    %v634 = vand.u32 %v60, 4294901760
    %635 = vmatpush.msra.mxu0 %v634
    %v636 = vand.u32 %v59, 4294901760
    %637 = vmatpush.msra.mxu0 %v636
    %v638 = vand.u32 %v58, 4294901760
    %639 = vmatpush.msra.mxu0 %v638
    %v640 = vand.u32 %v57, 4294901760
    %641 = vmatpush.msra.mxu0 %v640
    %v642 = vand.u32 %v34, 4294901760
    %v643 = vsub.f32 %v34, %v642
    %v644 = vand.u32 %v643, 4294901760
    %645 = vmatmul.f32.gmra.mxu0 %v644
    %v646 = vpop.f32.mrf.mxu0
    %v647 = vadd.f32 %v608, %v646
    %648 = vdwg.mxu0
    %v649 = vand.u32 %v72, 4294901760
    %v650 = vsub.f32 %v72, %v649
    %v651 = vand.u32 %v650, 4294901760
    %652 = vmatpush.msra.mxu0 %v651
    %v653 = vand.u32 %v71, 4294901760
    %v654 = vsub.f32 %v71, %v653
    %v655 = vand.u32 %v654, 4294901760
    %656 = vmatpush.msra.mxu0 %v655
    %v657 = vand.u32 %v70, 4294901760
    %v658 = vsub.f32 %v70, %v657
    %v659 = vand.u32 %v658, 4294901760
    %660 = vmatpush.msra.mxu0 %v659
    %v661 = vand.u32 %v69, 4294901760
    %v662 = vsub.f32 %v69, %v661
    %v663 = vand.u32 %v662, 4294901760
    %664 = vmatpush.msra.mxu0 %v663
    %v665 = vand.u32 %v68, 4294901760
    %v666 = vsub.f32 %v68, %v665
    %v667 = vand.u32 %v666, 4294901760
    %668 = vmatpush.msra.mxu0 %v667
    %v669 = vand.u32 %v67, 4294901760
    %v670 = vsub.f32 %v67, %v669
    %v671 = vand.u32 %v670, 4294901760
    %672 = vmatpush.msra.mxu0 %v671
    %v673 = vand.u32 %v66, 4294901760
    %v674 = vsub.f32 %v66, %v673
    %v675 = vand.u32 %v674, 4294901760
    %676 = vmatpush.msra.mxu0 %v675
    %v677 = vand.u32 %v65, 4294901760
    %v678 = vsub.f32 %v65, %v677
    %v679 = vand.u32 %v678, 4294901760
    %680 = vmatpush.msra.mxu0 %v679
    %v681 = vand.u32 %v64, 4294901760
    %v682 = vsub.f32 %v64, %v681
    %v683 = vand.u32 %v682, 4294901760
    %684 = vmatpush.msra.mxu0 %v683
    %v685 = vand.u32 %v63, 4294901760
    %v686 = vsub.f32 %v63, %v685
    %v687 = vand.u32 %v686, 4294901760
    %688 = vmatpush.msra.mxu0 %v687
    %v689 = vand.u32 %v62, 4294901760
    %v690 = vsub.f32 %v62, %v689
    %v691 = vand.u32 %v690, 4294901760
    %692 = vmatpush.msra.mxu0 %v691
    %v693 = vand.u32 %v61, 4294901760
    %v694 = vsub.f32 %v61, %v693
    %v695 = vand.u32 %v694, 4294901760
    %696 = vmatpush.msra.mxu0 %v695
    %v697 = vand.u32 %v60, 4294901760
    %v698 = vsub.f32 %v60, %v697
    %v699 = vand.u32 %v698, 4294901760
    %700 = vmatpush.msra.mxu0 %v699
    %v701 = vand.u32 %v59, 4294901760
    %v702 = vsub.f32 %v59, %v701
    %v703 = vand.u32 %v702, 4294901760
    %704 = vmatpush.msra.mxu0 %v703
    %v705 = vand.u32 %v58, 4294901760
    %v706 = vsub.f32 %v58, %v705
    %v707 = vand.u32 %v706, 4294901760
    %708 = vmatpush.msra.mxu0 %v707
    %v709 = vand.u32 %v57, 4294901760
    %v710 = vsub.f32 %v57, %v709
    %v711 = vand.u32 %v710, 4294901760
    %712 = vmatpush.msra.mxu0 %v711
    %v713 = vand.u32 %v34, 4294901760
    %714 = vmatmul.f32.gmra.mxu0 %v713
    %v715 = vpop.f32.mrf.mxu0
    %v716 = vadd.f32 %v647, %v715
    %717 = vdwg.mxu0
    %v718 = vand.u32 %v72, 4294901760
    %719 = vmatpush.msra.mxu0 %v718
    %v720 = vand.u32 %v71, 4294901760
    %721 = vmatpush.msra.mxu0 %v720
    %v722 = vand.u32 %v70, 4294901760
    %723 = vmatpush.msra.mxu0 %v722
    %v724 = vand.u32 %v69, 4294901760
    %725 = vmatpush.msra.mxu0 %v724
    %v726 = vand.u32 %v68, 4294901760
    %727 = vmatpush.msra.mxu0 %v726
    %v728 = vand.u32 %v67, 4294901760
    %729 = vmatpush.msra.mxu0 %v728
    %v730 = vand.u32 %v66, 4294901760
    %731 = vmatpush.msra.mxu0 %v730
    %v732 = vand.u32 %v65, 4294901760
    %733 = vmatpush.msra.mxu0 %v732
    %v734 = vand.u32 %v64, 4294901760
    %735 = vmatpush.msra.mxu0 %v734
    %v736 = vand.u32 %v63, 4294901760
    %737 = vmatpush.msra.mxu0 %v736
    %v738 = vand.u32 %v62, 4294901760
    %739 = vmatpush.msra.mxu0 %v738
    %v740 = vand.u32 %v61, 4294901760
    %741 = vmatpush.msra.mxu0 %v740
    %v742 = vand.u32 %v60, 4294901760
    %743 = vmatpush.msra.mxu0 %v742
    %v744 = vand.u32 %v59, 4294901760
    %745 = vmatpush.msra.mxu0 %v744
    %v746 = vand.u32 %v58, 4294901760
    %747 = vmatpush.msra.mxu0 %v746
    %v748 = vand.u32 %v57, 4294901760
    %749 = vmatpush.msra.mxu0 %v748
    %v750 = vand.u32 %v34, 4294901760
    %751 = vmatmul.f32.gmra.mxu0 %v750
    %v752 = vpop.f32.mrf.mxu0
    %v753 = vadd.f32 %v716, %v752
    %754 = vdwg.mxu0
    %v755 = vld [vmem:[%s4] sm:$0xff]
    %v756 = vld [vmem:[%s4 + $0x8] sm:$0x3]
    %vm757 = vcmask 80896
    %v759 = vsel %vm757, %v40, 0
    %vm761 = vcmask 1041408
    %v763 = vsel %vm761, %v756, 0
    %765 = vmatpush.msra.mxu0 0.0
    %766 = vmatpush.msra.mxu0 0.0
    %767 = vmatpush.msra.mxu0 0.0
    %768 = vmatpush.msra.mxu0 0.0
    %769 = vmatpush.msra.mxu0 0.0
    %770 = vmatpush.msra.mxu0 0.0
    %771 = vmatpush.msra.mxu0 0.0
    %772 = vmatpush.msra.mxu0 0.0
    %773 = vmatpush.msra.mxu0 0.0
    %774 = vmatpush.msra.mxu0 0.0
    %775 = vmatpush.msra.mxu0 0.0
    %776 = vmatpush.msra.mxu0 0.0
    %777 = vmatpush.msra.mxu0 0.0
    %778 = vmatpush.msra.mxu0 0.0
    %v779 = vand.u32 %v763, 4294901760
    %780 = vmatpush.msra.mxu0 %v779
    %v781 = vand.u32 %v755, 4294901760
    %782 = vmatpush.msra.mxu0 %v781
    %v783 = vand.u32 %v759, 4294901760
    %v784 = vsub.f32 %v759, %v783
    %v785 = vand.u32 %v784, 4294901760
    %v786 = vsub.f32 %v784, %v785
    %v787 = vand.u32 %v786, 4294901760
    %788 = vmatmul.f32.gmra.mxu0 %v787
    %v789 = vpop.f32.mrf.mxu0
    %v790 = vadd.f32 0.0, %v789
    %791 = vdwg.mxu0
    %792 = vmatpush.msra.mxu0 0.0
    %793 = vmatpush.msra.mxu0 0.0
    %794 = vmatpush.msra.mxu0 0.0
    %795 = vmatpush.msra.mxu0 0.0
    %796 = vmatpush.msra.mxu0 0.0
    %797 = vmatpush.msra.mxu0 0.0
    %798 = vmatpush.msra.mxu0 0.0
    %799 = vmatpush.msra.mxu0 0.0
    %800 = vmatpush.msra.mxu0 0.0
    %801 = vmatpush.msra.mxu0 0.0
    %802 = vmatpush.msra.mxu0 0.0
    %803 = vmatpush.msra.mxu0 0.0
    %804 = vmatpush.msra.mxu0 0.0
    %805 = vmatpush.msra.mxu0 0.0
    %v806 = vand.u32 %v763, 4294901760
    %v807 = vsub.f32 %v763, %v806
    %v808 = vand.u32 %v807, 4294901760
    %v809 = vsub.f32 %v807, %v808
    %v810 = vand.u32 %v809, 4294901760
    %811 = vmatpush.msra.mxu0 %v810
    %v812 = vand.u32 %v755, 4294901760
    %v813 = vsub.f32 %v755, %v812
    %v814 = vand.u32 %v813, 4294901760
    %v815 = vsub.f32 %v813, %v814
    %v816 = vand.u32 %v815, 4294901760
    %817 = vmatpush.msra.mxu0 %v816
    %v818 = vand.u32 %v759, 4294901760
    %819 = vmatmul.f32.gmra.mxu0 %v818
    %v820 = vpop.f32.mrf.mxu0
    %v821 = vadd.f32 %v790, %v820
    %822 = vdwg.mxu0
    %823 = vmatpush.msra.mxu0 0.0
    %824 = vmatpush.msra.mxu0 0.0
    %825 = vmatpush.msra.mxu0 0.0
    %826 = vmatpush.msra.mxu0 0.0
    %827 = vmatpush.msra.mxu0 0.0
    %828 = vmatpush.msra.mxu0 0.0
    %829 = vmatpush.msra.mxu0 0.0
    %830 = vmatpush.msra.mxu0 0.0
    %831 = vmatpush.msra.mxu0 0.0
    %832 = vmatpush.msra.mxu0 0.0
    %833 = vmatpush.msra.mxu0 0.0
    %834 = vmatpush.msra.mxu0 0.0
    %835 = vmatpush.msra.mxu0 0.0
    %836 = vmatpush.msra.mxu0 0.0
    %v837 = vand.u32 %v763, 4294901760
    %v838 = vsub.f32 %v763, %v837
    %839 = vmatpush.msra.mxu0 %v838
    %v840 = vand.u32 %v755, 4294901760
    %v841 = vsub.f32 %v755, %v840
    %842 = vmatpush.msra.mxu0 %v841
    %v843 = vand.u32 %v759, 4294901760
    %v844 = vsub.f32 %v759, %v843
    %845 = vmatmul.f32.gmra.mxu0 %v844
    %v846 = vpop.f32.mrf.mxu0
    %v847 = vadd.f32 %v821, %v846
    %848 = vdwg.mxu0
    %849 = vmatpush.msra.mxu0 0.0
    %850 = vmatpush.msra.mxu0 0.0
    %851 = vmatpush.msra.mxu0 0.0
    %852 = vmatpush.msra.mxu0 0.0
    %853 = vmatpush.msra.mxu0 0.0
    %854 = vmatpush.msra.mxu0 0.0
    %855 = vmatpush.msra.mxu0 0.0
    %856 = vmatpush.msra.mxu0 0.0
    %857 = vmatpush.msra.mxu0 0.0
    %858 = vmatpush.msra.mxu0 0.0
    %859 = vmatpush.msra.mxu0 0.0
    %860 = vmatpush.msra.mxu0 0.0
    %861 = vmatpush.msra.mxu0 0.0
    %862 = vmatpush.msra.mxu0 0.0
    %v863 = vand.u32 %v763, 4294901760
    %864 = vmatpush.msra.mxu0 %v863
    %v865 = vand.u32 %v755, 4294901760
    %866 = vmatpush.msra.mxu0 %v865
    %v867 = vand.u32 %v759, 4294901760
    %v868 = vsub.f32 %v759, %v867
    %v869 = vand.u32 %v868, 4294901760
    %870 = vmatmul.f32.gmra.mxu0 %v869
    %v871 = vpop.f32.mrf.mxu0
    %v872 = vadd.f32 %v847, %v871
    %873 = vdwg.mxu0
    %874 = vmatpush.msra.mxu0 0.0
    %875 = vmatpush.msra.mxu0 0.0
    %876 = vmatpush.msra.mxu0 0.0
    %877 = vmatpush.msra.mxu0 0.0
    %878 = vmatpush.msra.mxu0 0.0
    %879 = vmatpush.msra.mxu0 0.0
    %880 = vmatpush.msra.mxu0 0.0
    %881 = vmatpush.msra.mxu0 0.0
    %882 = vmatpush.msra.mxu0 0.0
    %883 = vmatpush.msra.mxu0 0.0
    %884 = vmatpush.msra.mxu0 0.0
    %885 = vmatpush.msra.mxu0 0.0
    %886 = vmatpush.msra.mxu0 0.0
    %887 = vmatpush.msra.mxu0 0.0
    %v888 = vand.u32 %v763, 4294901760
    %v889 = vsub.f32 %v763, %v888
    %v890 = vand.u32 %v889, 4294901760
    %891 = vmatpush.msra.mxu0 %v890
    %v892 = vand.u32 %v755, 4294901760
    %v893 = vsub.f32 %v755, %v892
    %v894 = vand.u32 %v893, 4294901760
    %895 = vmatpush.msra.mxu0 %v894
    %v896 = vand.u32 %v759, 4294901760
    %897 = vmatmul.f32.gmra.mxu0 %v896
    %v898 = vpop.f32.mrf.mxu0
    %v899 = vadd.f32 %v872, %v898
    %900 = vdwg.mxu0
    %901 = vmatpush.msra.mxu0 0.0
    %902 = vmatpush.msra.mxu0 0.0
    %903 = vmatpush.msra.mxu0 0.0
    %904 = vmatpush.msra.mxu0 0.0
    %905 = vmatpush.msra.mxu0 0.0
    %906 = vmatpush.msra.mxu0 0.0
    %907 = vmatpush.msra.mxu0 0.0
    %908 = vmatpush.msra.mxu0 0.0
    %909 = vmatpush.msra.mxu0 0.0
    %910 = vmatpush.msra.mxu0 0.0
    %911 = vmatpush.msra.mxu0 0.0
    %912 = vmatpush.msra.mxu0 0.0
    %913 = vmatpush.msra.mxu0 0.0
    %914 = vmatpush.msra.mxu0 0.0
    %v915 = vand.u32 %v763, 4294901760
    %916 = vmatpush.msra.mxu0 %v915
    %v917 = vand.u32 %v755, 4294901760
    %918 = vmatpush.msra.mxu0 %v917
    %v919 = vand.u32 %v759, 4294901760
    %920 = vmatmul.f32.gmra.mxu0 %v919
    %v921 = vpop.f32.mrf.mxu0
    %v922 = vadd.f32 %v899, %v921
    %923 = vdwg.mxu0
    %v924 = vld [vmem:[%s0] sm:$0xff]
    %v925 = vadd.f32 %v924, %v753
    %v926 = vadd.f32 %v925, %v922
    %vm927 = vcmask 261120
    %928 = vst.msk [vmem:[#allocation2] sm:$0xff] %vm927, %v926
    // Predicated region
    $region22: #{tpu_custom_call.1} parent=1 // pred_check
      _
    $region23: #{tpu_custom_call.1} parent=1 // pred_check_branch
      %930 = sbr.rel (0) target = $region25
    $region24: #{tpu_custom_call.1} parent=1 // pred_region
      %932 = vsyncadd [#allocation3], 0
      %s934 = sshll.u32 [#allocation2], 4
      %s935 = int_to_ptr.vmem [resolvable:$true] %s934
      %s936 = sshll.u32 %s5, 4
      %s937 = int_to_ptr.hbm [resolvable:$true] %s936
      %939 = dma.vmem_to_hbm [thread:$0]  %s935, 128, %s937, [#allocation3]
    $region25: #{tpu_custom_call.1} parent=1 // pred_fallthru
      _
    // Predicated region
    $region26: #{tpu_custom_call.1} parent=1 // pred_check
      _
    $region27: #{tpu_custom_call.1} parent=1 // pred_check_branch
      %941 = sbr.rel (0) target = $region29
    $region28: #{tpu_custom_call.1} parent=1 // pred_region
      %943 = dma.done [#allocation3], 128
    $region29: #{tpu_custom_call.1} parent=1 // pred_fallthru
      _
    %944 = vsyncpa [#allocation3], 1

</llo_original>
